<compile_context>
chip_gen: v7x
topology: tpu7x:2x2x1
jax: 0.10.0
libtpu: 0.0.40
codegen_flags: <defaults>
</compile_context>

<pallas_src>
import functools

import jax
import jax.numpy as jnp
from jax.experimental import pallas as pl
from jax.experimental.pallas import tpu as pltpu


def _round_up(x, m):
    return ((x + m - 1) // m) * m


def _ac_kernel(x_ref, w_ref, b_ref, out_ref, *, compute_dtype):
    """Fused actor+critic MLP on one lane-packed hidden state.

    x_ref  : (TILE_B, P) f32      padded state
    w_ref  : (n_stages, P, P)     packed weights (stage 0 = input layer,
                                  stages 1..n-2 = hidden, stage n-1 = output)
    b_ref  : (n_stages, P) f32    packed biases
    out_ref: (TILE_B, P) f32      lane-dense output slab
    """
    n_stages = w_ref.shape[0]
    h = x_ref[...]                                        # (TILE_B, P) f32
    for s in range(n_stages):                             # static unroll (small)
        y = jnp.dot(h.astype(compute_dtype), w_ref[s],
                    preferred_element_type=jnp.float32)
        y = y + b_ref[s:s + 1, :]                         # f32 bias add, (1, P) bcast
        if 0 < s < n_stages - 1:
            # Dropout(eval) == identity; ReLU only follows the hidden Linears.
            y = jnp.maximum(y, 0.0)
        h = y
    out_ref[...] = h.astype(out_ref.dtype)


def _pack_params(actor_params, critic_params, P, weight_dtype):
    """Pack actor+critic Linear stacks into one block-diagonal weight slab."""
    S, H = actor_params["w0"].shape
    A = actor_params["wo"].shape[1]
    n_layers = actor_params["wh"].shape[0]
    n_stages = n_layers + 2

    W = jnp.zeros((n_stages, P, P), jnp.float32)
    B = jnp.zeros((n_stages, P), jnp.float32)

    # stage 0: input layer (S -> 2H packed)
    W = W.at[0, :S, :H].set(actor_params["w0"])
    W = W.at[0, :S, H:2 * H].set(critic_params["w0"])
    B = B.at[0, :H].set(actor_params["b0"].reshape(H))
    B = B.at[0, H:2 * H].set(critic_params["b0"].reshape(H))

    # hidden stages: block-diagonal (2H -> 2H packed)
    for l in range(n_layers):
        W = W.at[l + 1, :H, :H].set(actor_params["wh"][l])
        W = W.at[l + 1, H:2 * H, H:2 * H].set(critic_params["wh"][l])
        B = B.at[l + 1, :H].set(actor_params["bh"][l].reshape(H))
        B = B.at[l + 1, H:2 * H].set(critic_params["bh"][l].reshape(H))

    # output stage: actor -> lanes [0:A), critic -> lane A
    W = W.at[n_stages - 1, :H, :A].set(actor_params["wo"])
    W = W.at[n_stages - 1, H:2 * H, A:A + 1].set(critic_params["wo"])
    B = B.at[n_stages - 1, :A].set(actor_params["bo"].reshape(A))
    B = B.at[n_stages - 1, A:A + 1].set(critic_params["bo"].reshape(1))

    return W.astype(weight_dtype), B


def actor_critic_forward(state, actor_params, critic_params, *,
                         compute_dtype=jnp.float32, max_tile_b=256):
    """state: (B, S) float32. Returns (action_pred (B, A), value_pred (B, 1))."""
    B, S = state.shape
    H = actor_params["w0"].shape[1]
    A = actor_params["wo"].shape[1]
    n_layers = actor_params["wh"].shape[0]
    n_stages = n_layers + 2

    # Lane-packed width: actor lanes [0:H), critic lanes [H:2H), padded to 128.
    P = _round_up(max(S, 2 * H, A + 1), 128)

    W, Bias = _pack_params(actor_params, critic_params, P, compute_dtype)

    # Batch tiling: one tile for small B; shard big rollout batches across the
    # grid (parallel -> both TensorCores on v7x, pipelined everywhere).
    tile_b = min(_round_up(B, 8), max_tile_b)
    Bp = _round_up(B, tile_b)
    x = jnp.zeros((Bp, P), jnp.float32).at[:B, :S].set(state.astype(jnp.float32))

    out = pl.pallas_call(
        functools.partial(_ac_kernel, compute_dtype=compute_dtype),
        out_shape=jax.ShapeDtypeStruct((Bp, P), jnp.float32),
        grid_spec=pltpu.PrefetchScalarGridSpec(
            num_scalar_prefetch=0,
            grid=(Bp // tile_b,),
            in_specs=[
                pl.BlockSpec((tile_b, P), lambda i: (i, 0)),         # state tile
                pl.BlockSpec((n_stages, P, P), lambda i: (0, 0, 0)),  # weights (resident)
                pl.BlockSpec((n_stages, P), lambda i: (0, 0)),        # biases (resident)
            ],
            out_specs=pl.BlockSpec((tile_b, P), lambda i: (i, 0)),
        ),
        compiler_params=pltpu.CompilerParams(
            dimension_semantics=("parallel",)),
    )(x, W, Bias)

    action_pred = out[:B, :A]
    value_pred = out[:B, A:A + 1]
    return action_pred, value_pred


def _init_mlp_params(key, state_space, size, n_layers, out_dim):
    """Deterministic init of the Linear stack (weights stored (in, out))."""
    k0, k1, k2 = jax.random.split(key, 3)
    scale = 0.1
    w0 = scale * jax.random.normal(k0, (state_space, size), jnp.float32)
    b0 = jnp.zeros((1, size), jnp.float32)
    wh = scale * jax.random.normal(k1, (n_layers, size, size), jnp.float32)
    bh = jnp.zeros((n_layers, 1, size), jnp.float32)
    wo = scale * jax.random.normal(k2, (size, out_dim), jnp.float32)
    bo = jnp.zeros((1, out_dim), jnp.float32)
    return {"w0": w0, "b0": b0, "wh": wh, "bh": bh, "wo": wo, "bo": bo}


def _reference_forward(state, p):
    h = state @ p["w0"] + p["b0"]
    for l in range(p["wh"].shape[0]):
        h = h @ p["wh"][l] + p["bh"][l]
        h = jnp.maximum(h, 0.0)          # Dropout(eval) == identity
    return h @ p["wo"] + p["bo"]


if __name__ == "__main__":
    # CartPole-v1: state_space=4, action_space=2; small hidden size / layers.
    batch, state_space, action_space, size, n_layers = 8, 4, 2, 32, 2

    key = jax.random.PRNGKey(0)
    k_state, k_actor, k_critic = jax.random.split(key, 3)

    state = jax.random.normal(k_state, (batch, state_space), jnp.float32)
    actor_params = _init_mlp_params(k_actor, state_space, size, n_layers, action_space)
    critic_params = _init_mlp_params(k_critic, state_space, size, n_layers, 1)

    # f32 compute path
    action_pred, value_pred = actor_critic_forward(state, actor_params, critic_params)
    jax.block_until_ready((action_pred, value_pred))

    ref_act = _reference_forward(state, actor_params)
    ref_val = _reference_forward(state, critic_params)
    assert action_pred.shape == (batch, action_space)
    assert value_pred.shape == (batch, 1)
    assert jnp.allclose(action_pred, ref_act, atol=1e-4), "actor f32 mismatch"
    assert jnp.allclose(value_pred, ref_val, atol=1e-4), "critic f32 mismatch"

    # bf16-weight compute path (v6e/v7x fast path), validated with looser tol.
    act_bf, val_bf = actor_critic_forward(state, actor_params, critic_params,
                                          compute_dtype=jnp.bfloat16)
    jax.block_until_ready((act_bf, val_bf))
    assert jnp.allclose(act_bf, ref_act, atol=2e-2), "actor bf16 mismatch"
    assert jnp.allclose(val_bf, ref_val, atol=2e-2), "critic bf16 mismatch"

    print("KERNEL_OK")
</pallas_src>

<mosaic_0001>
module attributes {stable_mosaic.version = 11 : i64} {
  func.func @_ac_kernel(%arg0: i32, %arg1: memref<8x128xf32, #tpu.memory_space<vmem>>, %arg2: memref<4x128x128xf32, #tpu.memory_space<vmem>>, %arg3: memref<4x128xf32, #tpu.memory_space<vmem>>, %arg4: memref<8x128xf32, #tpu.memory_space<vmem>>) attributes {dimension_semantics = [#tpu.dimension_semantics<parallel>], iteration_bounds = array<i64: 1>, scalar_prefetch = 0 : i64, scratch_operands = 0 : i64, tpu.core_type = #tpu.core_type<tc>, window_params = [{transform_indices = @transform_0, window_bounds = array<i64: 8, 128>}, {pipeline_mode = #tpu.pipeline_mode<synchronous>, transform_indices = @transform_1, window_bounds = array<i64: 4, 128, 128>}, {pipeline_mode = #tpu.pipeline_mode<synchronous>, transform_indices = @transform_2, window_bounds = array<i64: 4, 128>}, {transform_indices = @transform_3, window_bounds = array<i64: 8, 128>}]} {
    %c0 = arith.constant 0 : index
    %c0_0 = arith.constant 0 : index
    %0 = vector.load %arg1[%c0, %c0_0] : memref<8x128xf32, #tpu.memory_space<vmem>>, vector<8x128xf32>
    %c0_1 = arith.constant 0 : index
    %c0_2 = arith.constant 0 : index
    %c0_3 = arith.constant 0 : index
    %1 = vector.load %arg2[%c0_1, %c0_2, %c0_3] : memref<4x128x128xf32, #tpu.memory_space<vmem>>, vector<1x128x128xf32>
    %2 = vector.shape_cast %1 : vector<1x128x128xf32> to vector<128x128xf32>
    %cst = arith.constant dense<0.000000e+00> : vector<8x128xf32>
    %3 = tpu.matmul %0, %2, %cst {dimension_numbers = #tpu.dot_dimension_numbers<[1], [0], [0], [1], [0, 0, 1, 1], [], []>} : vector<8x128xf32>, vector<128x128xf32>, vector<8x128xf32> -> vector<8x128xf32>
    %c0_4 = arith.constant 0 : index
    %c0_5 = arith.constant 0 : index
    %4 = vector.load %arg3[%c0_4, %c0_5] : memref<4x128xf32, #tpu.memory_space<vmem>>, vector<1x128xf32>
    %5 = vector.broadcast %4 : vector<1x128xf32> to vector<8x128xf32>
    %6 = arith.addf %3, %5 : vector<8x128xf32>
    %c1 = arith.constant 1 : index
    %c0_6 = arith.constant 0 : index
    %c0_7 = arith.constant 0 : index
    %7 = vector.load %arg2[%c1, %c0_6, %c0_7] : memref<4x128x128xf32, #tpu.memory_space<vmem>>, vector<1x128x128xf32>
    %8 = vector.shape_cast %7 : vector<1x128x128xf32> to vector<128x128xf32>
    %cst_8 = arith.constant dense<0.000000e+00> : vector<8x128xf32>
    %9 = tpu.matmul %6, %8, %cst_8 {dimension_numbers = #tpu.dot_dimension_numbers<[1], [0], [0], [1], [0, 0, 1, 1], [], []>} : vector<8x128xf32>, vector<128x128xf32>, vector<8x128xf32> -> vector<8x128xf32>
    %c1_9 = arith.constant 1 : index
    %c0_10 = arith.constant 0 : index
    %10 = vector.load %arg3[%c1_9, %c0_10] : memref<4x128xf32, #tpu.memory_space<vmem>>, vector<1x128xf32>
    %11 = vector.broadcast %10 : vector<1x128xf32> to vector<8x128xf32>
    %12 = arith.addf %9, %11 : vector<8x128xf32>
    %cst_11 = arith.constant 0.000000e+00 : f32
    %13 = vector.broadcast %cst_11 : f32 to vector<8x128xf32>
    %14 = arith.maximumf %12, %13 : vector<8x128xf32>
    %c2 = arith.constant 2 : index
    %c0_12 = arith.constant 0 : index
    %c0_13 = arith.constant 0 : index
    %15 = vector.load %arg2[%c2, %c0_12, %c0_13] : memref<4x128x128xf32, #tpu.memory_space<vmem>>, vector<1x128x128xf32>
    %16 = vector.shape_cast %15 : vector<1x128x128xf32> to vector<128x128xf32>
    %cst_14 = arith.constant dense<0.000000e+00> : vector<8x128xf32>
    %17 = tpu.matmul %14, %16, %cst_14 {dimension_numbers = #tpu.dot_dimension_numbers<[1], [0], [0], [1], [0, 0, 1, 1], [], []>} : vector<8x128xf32>, vector<128x128xf32>, vector<8x128xf32> -> vector<8x128xf32>
    %c2_15 = arith.constant 2 : index
    %c0_16 = arith.constant 0 : index
    %18 = vector.load %arg3[%c2_15, %c0_16] : memref<4x128xf32, #tpu.memory_space<vmem>>, vector<1x128xf32>
    %19 = vector.broadcast %18 : vector<1x128xf32> to vector<8x128xf32>
    %20 = arith.addf %17, %19 : vector<8x128xf32>
    %cst_17 = arith.constant 0.000000e+00 : f32
    %21 = vector.broadcast %cst_17 : f32 to vector<8x128xf32>
    %22 = arith.maximumf %20, %21 : vector<8x128xf32>
    %c3 = arith.constant 3 : index
    %c0_18 = arith.constant 0 : index
    %c0_19 = arith.constant 0 : index
    %23 = vector.load %arg2[%c3, %c0_18, %c0_19] : memref<4x128x128xf32, #tpu.memory_space<vmem>>, vector<1x128x128xf32>
    %24 = vector.shape_cast %23 : vector<1x128x128xf32> to vector<128x128xf32>
    %cst_20 = arith.constant dense<0.000000e+00> : vector<8x128xf32>
    %25 = tpu.matmul %22, %24, %cst_20 {dimension_numbers = #tpu.dot_dimension_numbers<[1], [0], [0], [1], [0, 0, 1, 1], [], []>} : vector<8x128xf32>, vector<128x128xf32>, vector<8x128xf32> -> vector<8x128xf32>
    %c3_21 = arith.constant 3 : index
    %c0_22 = arith.constant 0 : index
    %26 = vector.load %arg3[%c3_21, %c0_22] : memref<4x128xf32, #tpu.memory_space<vmem>>, vector<1x128xf32>
    %27 = vector.broadcast %26 : vector<1x128xf32> to vector<8x128xf32>
    %28 = arith.addf %25, %27 : vector<8x128xf32>
    %c0_23 = arith.constant 0 : index
    %c0_24 = arith.constant 0 : index
    %29 = vector.load %arg4[%c0_23, %c0_24] : memref<8x128xf32, #tpu.memory_space<vmem>>, vector<8x128xf32>
    tpu.vector_store %arg4[%c0_23, %c0_24], %28 {strides = array<i32>} : memref<8x128xf32, #tpu.memory_space<vmem>>, vector<8x128xf32>,
    return
  }
  func.func @transform_0(%arg0: i32) -> (i32, i32) {
    %c0_i32 = arith.constant 0 : i32
    %c0_i32_0 = arith.constant 0 : i32
    return %arg0, %c0_i32 : i32, i32
  }
  func.func @transform_1(%arg0: i32) -> (i32, i32, i32) {
    %c0_i32 = arith.constant 0 : i32
    %c0_i32_0 = arith.constant 0 : i32
    %c0_i32_1 = arith.constant 0 : i32
    %c0_i32_2 = arith.constant 0 : i32
    return %c0_i32, %c0_i32_0, %c0_i32_1 : i32, i32, i32
  }
  func.func @transform_2(%arg0: i32) -> (i32, i32) {
    %c0_i32 = arith.constant 0 : i32
    %c0_i32_0 = arith.constant 0 : i32
    %c0_i32_1 = arith.constant 0 : i32
    return %c0_i32, %c0_i32_0 : i32, i32
  }
  func.func @transform_3(%arg0: i32) -> (i32, i32) {
    %c0_i32 = arith.constant 0 : i32
    %c0_i32_0 = arith.constant 0 : i32
    return %arg0, %c0_i32 : i32, i32
  }
}

</mosaic_0001>

<llo_original>
// kernel: tpu_custom_call.1
$region0: #{tpu_custom_call.1}
  #allocation0 [shape = 'u32[]', space=smem, size = 0x4, offset = 0x4, fixed_abs, tag = 'smem constant byte address 0x4 - core index']
  #allocation1 [shape = 'u32[144,128]{1,0:T(1,128)}', space=vmem, size = 0x12000, scoped, tag = 'internal scratch']
  %s0 = inlined_call_operand.hbm [shape: f32[8,128], index: 0, kind: input, shape index: {}]
  %s1 = inlined_call_operand.hbm [shape: f32[4,128,128], index: 1, kind: input, shape index: {}]
  %s2 = inlined_call_operand.vmem [shape: f32[4,128], index: 2, kind: input, shape index: {}]
  %s3 = inlined_call_operand.hbm [shape: f32[8,128], index: 3, kind: output, shape index: {}]
  %s4 = sld [smem:[#allocation0]]
  $region30: #{tpu_custom_call.1} parent=0
    _
  %s6 = ssub.s32 1, %s4
  %s7 = scalar_select 0, %s6, %s4
  $region1: #{tpu_custom_call.1} parent=0
    #allocation2 [shape = 'u8[4096]{0}', space=vmem, size = 0x1000, scoped, tag = 'input window, operand 0, single buffered']
    #allocation3 [shape = 's32[1]{0}', space=sflag, size = 0x4, scoped, tag = 'scoped memory for tpu_custom_call.1']
    #allocation4 [shape = 's32[1]{0}', space=sflag, size = 0x4, scoped, tag = 'scoped memory for tpu_custom_call.1']
    #allocation5 [shape = 'u8[262144]{0}', space=vmem, size = 0x40000, scoped, tag = 'input window, operand 1, single buffered']
    #allocation6 [shape = 's32[1]{0}', space=sflag, size = 0x4, scoped, tag = 'scoped memory for tpu_custom_call.1']
    #allocation7 [shape = 'u8[4096]{0}', space=vmem, size = 0x1000, scoped, tag = 'output window, operand 0, single buffered']
    %8 = vsyncpa [#allocation3], 0
    %9 = vsyncpa [#allocation6], 0
    %10 = vsyncpa [#allocation4], 0
    // Predicated region
    $region2: #{tpu_custom_call.1} parent=1 // pred_check
      _
    $region3: #{tpu_custom_call.1} parent=1 // pred_check_branch
      %12 = sbr.rel (0) target = $region5
    $region4: #{tpu_custom_call.1} parent=1 // pred_region
      %s14 = ssub.s32 128, 128
      %15 = vsyncadd [#allocation3], %s14
      %s17 = sshll.u32 [#allocation2], 4
      %s18 = int_to_ptr.vmem [resolvable:$true] %s17
      %20 = dma.hbm_to_vmem [thread:$0]  %s0, 128, %s18, [#allocation3]
    $region5: #{tpu_custom_call.1} parent=1 // pred_fallthru
      _
    // Predicated region
    $region6: #{tpu_custom_call.1} parent=1 // pred_check
      _
    $region7: #{tpu_custom_call.1} parent=1 // pred_check_branch
      %22 = sbr.rel (0) target = $region9
    $region8: #{tpu_custom_call.1} parent=1 // pred_region
      %s24 = ssub.s32 8192, 8192
      %25 = vsyncadd [#allocation6], %s24
      %s26 = sshll.u32 [#allocation5], 4
      %s27 = int_to_ptr.vmem [resolvable:$true] %s26
      %32 = dma.hbm_to_vmem [thread:$0]  %s1, 8192, %s27, [#allocation6], 128, 128, 8
    $region9: #{tpu_custom_call.1} parent=1 // pred_fallthru
      _
    // Predicated region
    $region10: #{tpu_custom_call.1} parent=1 // pred_check
      _
    $region11: #{tpu_custom_call.1} parent=1 // pred_check_branch
      %34 = sbr.rel (0) target = $region13
    $region12: #{tpu_custom_call.1} parent=1 // pred_region
      _
    $region13: #{tpu_custom_call.1} parent=1 // pred_fallthru
      _
    // Predicated region
    $region14: #{tpu_custom_call.1} parent=1 // pred_check
      _
    $region15: #{tpu_custom_call.1} parent=1 // pred_check_branch
      %36 = sbr.rel (0) target = $region17
    $region16: #{tpu_custom_call.1} parent=1 // pred_region
      %37 = dma.done [#allocation3], 128
    $region17: #{tpu_custom_call.1} parent=1 // pred_fallthru
      _
    // Predicated region
    $region18: #{tpu_custom_call.1} parent=1 // pred_check
      _
    $region19: #{tpu_custom_call.1} parent=1 // pred_check_branch
      %39 = sbr.rel (0) target = $region21
    $region20: #{tpu_custom_call.1} parent=1 // pred_region
      %40 = dma.done [#allocation6], 8192
    $region21: #{tpu_custom_call.1} parent=1 // pred_fallthru
      _
    %v41 = vld [vmem:[#allocation2] sm:$0xff]
    %v42 = vld [vmem:[#allocation5] sm:$0xff]
    %v43 = vld [vmem:[#allocation5 + $0x8] sm:$0xff]
    %v44 = vld [vmem:[#allocation5 + $0x10] sm:$0xff]
    %v45 = vld [vmem:[#allocation5 + $0x18] sm:$0xff]
    %v46 = vld [vmem:[#allocation5 + $0x20] sm:$0xff]
    %v47 = vld [vmem:[#allocation5 + $0x28] sm:$0xff]
    %v48 = vld [vmem:[#allocation5 + $0x30] sm:$0xff]
    %v49 = vld [vmem:[#allocation5 + $0x38] sm:$0xff]
    %v50 = vld [vmem:[#allocation5 + $0x40] sm:$0xff]
    %v51 = vld [vmem:[#allocation5 + $0x48] sm:$0xff]
    %v52 = vld [vmem:[#allocation5 + $0x50] sm:$0xff]
    %v53 = vld [vmem:[#allocation5 + $0x58] sm:$0xff]
    %v54 = vld [vmem:[#allocation5 + $0x60] sm:$0xff]
    %v55 = vld [vmem:[#allocation5 + $0x68] sm:$0xff]
    %v56 = vld [vmem:[#allocation5 + $0x70] sm:$0xff]
    %v57 = vld [vmem:[#allocation5 + $0x78] sm:$0xff]
    %v58 = vld [vmem:[%s2] sm:$0x1]
    %v59 = vlaneseq
    %v60 = vshrl.u32 %v59, 7
    %v61 = vsub.s32 0, %v60
    %v62 = vrot.slane %v58, %v61
    %63 = vmatprep.subr.mxu0 0.0
    %64 = vmatpush1.msra.mxu0 %v42
    %65 = vmatprep.subr.mxu0 0.0
    %66 = vmatpush1.msra.mxu0 %v43
    %67 = vmatprep.subr.mxu0 0.0
    %68 = vmatpush1.msra.mxu0 %v44
    %69 = vmatprep.subr.mxu0 0.0
    %70 = vmatpush1.msra.mxu0 %v45
    %71 = vmatprep.subr.mxu0 0.0
    %72 = vmatpush1.msra.mxu0 %v46
    %73 = vmatprep.subr.mxu0 0.0
    %74 = vmatpush1.msra.mxu0 %v47
    %75 = vmatprep.subr.mxu0 0.0
    %76 = vmatpush1.msra.mxu0 %v48
    %77 = vmatprep.subr.mxu0 0.0
    %78 = vmatpush1.msra.mxu0 %v49
    %79 = vmatprep.subr.mxu0 0.0
    %80 = vmatpush1.msra.mxu0 %v50
    %81 = vmatprep.subr.mxu0 0.0
    %82 = vmatpush1.msra.mxu0 %v51
    %83 = vmatprep.subr.mxu0 0.0
    %84 = vmatpush1.msra.mxu0 %v52
    %85 = vmatprep.subr.mxu0 0.0
    %86 = vmatpush1.msra.mxu0 %v53
    %87 = vmatprep.subr.mxu0 0.0
    %88 = vmatpush1.msra.mxu0 %v54
    %89 = vmatprep.subr.mxu0 0.0
    %90 = vmatpush1.msra.mxu0 %v55
    %91 = vmatprep.subr.mxu0 0.0
    %92 = vmatpush1.msra.mxu0 %v56
    %93 = vmatprep.subr.mxu0 0.0
    %94 = vmatpush1.msra.mxu0 %v57
    %95 = vmatprep.subr.mxu0 0.0
    %96 = vmatpush1.msra.mxu0 0.0
    %97 = vmatprep.subr.mxu0 0.0
    %98 = vmatpush1.msra.mxu0 0.0
    %99 = vmatprep.subr.mxu0 0.0
    %100 = vmatpush1.msra.mxu0 0.0
    %101 = vmatprep.subr.mxu0 0.0
    %102 = vmatpush1.msra.mxu0 0.0
    %103 = vmatprep.subr.mxu0 0.0
    %104 = vmatpush1.msra.mxu0 0.0
    %105 = vmatprep.subr.mxu0 0.0
    %106 = vmatpush1.msra.mxu0 0.0
    %107 = vmatprep.subr.mxu0 0.0
    %108 = vmatpush1.msra.mxu0 0.0
    %109 = vmatprep.subr.mxu0 0.0
    %110 = vmatpush1.msra.mxu0 0.0
    %111 = vmatprep.subr.mxu0 0.0
    %112 = vmatpush1.msra.mxu0 0.0
    %113 = vmatprep.subr.mxu0 0.0
    %114 = vmatpush1.msra.mxu0 0.0
    %115 = vmatprep.subr.mxu0 0.0
    %116 = vmatpush1.msra.mxu0 0.0
    %117 = vmatprep.subr.mxu0 0.0
    %118 = vmatpush1.msra.mxu0 0.0
    %119 = vmatprep.subr.mxu0 0.0
    %120 = vmatpush1.msra.mxu0 0.0
    %121 = vmatprep.subr.mxu0 0.0
    %122 = vmatpush1.msra.mxu0 0.0
    %123 = vmatprep.subr.mxu0 0.0
    %124 = vmatpush1.msra.mxu0 0.0
    %125 = vmatprep.subr.mxu0 0.0
    %126 = vmatpush1.msra.mxu0 0.0
    %127 = vmatprep.mubr.f32.mxu0 0.0
    %128 = vmatmul.mubr.f32.gmra.mrb[0].mxu0 %v41
    %v129 = vpop.f32.mrb[0].mxu0
    %v130 = vadd.f32 %v62, %v129
    %v131 = vpop.f32.mrb[0].mxu0
    %132 = vdwg.mxu0
    %s133 = scalar_lea.vmem [#allocation5], 128
    %v134 = vld [vmem:[%s133] sm:$0xff]
    %v135 = vld [vmem:[%s133 + $0x8] sm:$0xff]
    %v136 = vld [vmem:[%s133 + $0x10] sm:$0xff]
    %v137 = vld [vmem:[%s133 + $0x18] sm:$0xff]
    %v138 = vld [vmem:[%s133 + $0x20] sm:$0xff]
    %v139 = vld [vmem:[%s133 + $0x28] sm:$0xff]
    %v140 = vld [vmem:[%s133 + $0x30] sm:$0xff]
    %v141 = vld [vmem:[%s133 + $0x38] sm:$0xff]
    %v142 = vld [vmem:[%s133 + $0x40] sm:$0xff]
    %v143 = vld [vmem:[%s133 + $0x48] sm:$0xff]
    %v144 = vld [vmem:[%s133 + $0x50] sm:$0xff]
    %v145 = vld [vmem:[%s133 + $0x58] sm:$0xff]
    %v146 = vld [vmem:[%s133 + $0x60] sm:$0xff]
    %v147 = vld [vmem:[%s133 + $0x68] sm:$0xff]
    %v148 = vld [vmem:[%s133 + $0x70] sm:$0xff]
    %v149 = vld [vmem:[%s133 + $0x78] sm:$0xff]
    %v150 = vld [vmem:[%s2 + $0x1] sm:$0x1]
    %v151 = vlaneseq
    %v152 = vshrl.u32 %v151, 7
    %v153 = vsub.s32 0, %v152
    %v154 = vrot.slane %v150, %v153
    %155 = vmatprep.subr.mxu0 0.0
    %156 = vmatpush1.msra.mxu0 %v134
    %157 = vmatprep.subr.mxu0 0.0
    %158 = vmatpush1.msra.mxu0 %v135
    %159 = vmatprep.subr.mxu0 0.0
    %160 = vmatpush1.msra.mxu0 %v136
    %161 = vmatprep.subr.mxu0 0.0
    %162 = vmatpush1.msra.mxu0 %v137
    %163 = vmatprep.subr.mxu0 0.0
    %164 = vmatpush1.msra.mxu0 %v138
    %165 = vmatprep.subr.mxu0 0.0
    %166 = vmatpush1.msra.mxu0 %v139
    %167 = vmatprep.subr.mxu0 0.0
    %168 = vmatpush1.msra.mxu0 %v140
    %169 = vmatprep.subr.mxu0 0.0
    %170 = vmatpush1.msra.mxu0 %v141
    %171 = vmatprep.subr.mxu0 0.0
    %172 = vmatpush1.msra.mxu0 %v142
    %173 = vmatprep.subr.mxu0 0.0
    %174 = vmatpush1.msra.mxu0 %v143
    %175 = vmatprep.subr.mxu0 0.0
    %176 = vmatpush1.msra.mxu0 %v144
    %177 = vmatprep.subr.mxu0 0.0
    %178 = vmatpush1.msra.mxu0 %v145
    %179 = vmatprep.subr.mxu0 0.0
    %180 = vmatpush1.msra.mxu0 %v146
    %181 = vmatprep.subr.mxu0 0.0
    %182 = vmatpush1.msra.mxu0 %v147
    %183 = vmatprep.subr.mxu0 0.0
    %184 = vmatpush1.msra.mxu0 %v148
    %185 = vmatprep.subr.mxu0 0.0
    %186 = vmatpush1.msra.mxu0 %v149
    %187 = vmatprep.subr.mxu0 0.0
    %188 = vmatpush1.msra.mxu0 0.0
    %189 = vmatprep.subr.mxu0 0.0
    %190 = vmatpush1.msra.mxu0 0.0
    %191 = vmatprep.subr.mxu0 0.0
    %192 = vmatpush1.msra.mxu0 0.0
    %193 = vmatprep.subr.mxu0 0.0
    %194 = vmatpush1.msra.mxu0 0.0
    %195 = vmatprep.subr.mxu0 0.0
    %196 = vmatpush1.msra.mxu0 0.0
    %197 = vmatprep.subr.mxu0 0.0
    %198 = vmatpush1.msra.mxu0 0.0
    %199 = vmatprep.subr.mxu0 0.0
    %200 = vmatpush1.msra.mxu0 0.0
    %201 = vmatprep.subr.mxu0 0.0
    %202 = vmatpush1.msra.mxu0 0.0
    %203 = vmatprep.subr.mxu0 0.0
    %204 = vmatpush1.msra.mxu0 0.0
    %205 = vmatprep.subr.mxu0 0.0
    %206 = vmatpush1.msra.mxu0 0.0
    %207 = vmatprep.subr.mxu0 0.0
    %208 = vmatpush1.msra.mxu0 0.0
    %209 = vmatprep.subr.mxu0 0.0
    %210 = vmatpush1.msra.mxu0 0.0
    %211 = vmatprep.subr.mxu0 0.0
    %212 = vmatpush1.msra.mxu0 0.0
    %213 = vmatprep.subr.mxu0 0.0
    %214 = vmatpush1.msra.mxu0 0.0
    %215 = vmatprep.subr.mxu0 0.0
    %216 = vmatpush1.msra.mxu0 0.0
    %217 = vmatprep.subr.mxu0 0.0
    %218 = vmatpush1.msra.mxu0 0.0
    %219 = vmatprep.mubr.f32.mxu0 0.0
    %220 = vmatmul.mubr.f32.gmra.mrb[0].mxu0 %v130
    %v221 = vpop.f32.mrb[0].mxu0
    %v222 = vadd.f32 %v154, %v221
    %v223 = vpop.f32.mrb[0].mxu0
    %224 = vdwg.mxu0
    %v225 = vmax.f32 %v222, 0.0
    %s226 = scalar_lea.vmem [#allocation5], 256
    %v227 = vld [vmem:[%s226] sm:$0xff]
    %v228 = vld [vmem:[%s226 + $0x8] sm:$0xff]
    %v229 = vld [vmem:[%s226 + $0x10] sm:$0xff]
    %v230 = vld [vmem:[%s226 + $0x18] sm:$0xff]
    %v231 = vld [vmem:[%s226 + $0x20] sm:$0xff]
    %v232 = vld [vmem:[%s226 + $0x28] sm:$0xff]
    %v233 = vld [vmem:[%s226 + $0x30] sm:$0xff]
    %v234 = vld [vmem:[%s226 + $0x38] sm:$0xff]
    %v235 = vld [vmem:[%s226 + $0x40] sm:$0xff]
    %v236 = vld [vmem:[%s226 + $0x48] sm:$0xff]
    %v237 = vld [vmem:[%s226 + $0x50] sm:$0xff]
    %v238 = vld [vmem:[%s226 + $0x58] sm:$0xff]
    %v239 = vld [vmem:[%s226 + $0x60] sm:$0xff]
    %v240 = vld [vmem:[%s226 + $0x68] sm:$0xff]
    %v241 = vld [vmem:[%s226 + $0x70] sm:$0xff]
    %v242 = vld [vmem:[%s226 + $0x78] sm:$0xff]
    %v243 = vld [vmem:[%s2 + $0x2] sm:$0x1]
    %v244 = vlaneseq
    %v245 = vshrl.u32 %v244, 7
    %v246 = vsub.s32 0, %v245
    %v247 = vrot.slane %v243, %v246
    %248 = vmatprep.subr.mxu0 0.0
    %249 = vmatpush1.msra.mxu0 %v227
    %250 = vmatprep.subr.mxu0 0.0
    %251 = vmatpush1.msra.mxu0 %v228
    %252 = vmatprep.subr.mxu0 0.0
    %253 = vmatpush1.msra.mxu0 %v229
    %254 = vmatprep.subr.mxu0 0.0
    %255 = vmatpush1.msra.mxu0 %v230
    %256 = vmatprep.subr.mxu0 0.0
    %257 = vmatpush1.msra.mxu0 %v231
    %258 = vmatprep.subr.mxu0 0.0
    %259 = vmatpush1.msra.mxu0 %v232
    %260 = vmatprep.subr.mxu0 0.0
    %261 = vmatpush1.msra.mxu0 %v233
    %262 = vmatprep.subr.mxu0 0.0
    %263 = vmatpush1.msra.mxu0 %v234
    %264 = vmatprep.subr.mxu0 0.0
    %265 = vmatpush1.msra.mxu0 %v235
    %266 = vmatprep.subr.mxu0 0.0
    %267 = vmatpush1.msra.mxu0 %v236
    %268 = vmatprep.subr.mxu0 0.0
    %269 = vmatpush1.msra.mxu0 %v237
    %270 = vmatprep.subr.mxu0 0.0
    %271 = vmatpush1.msra.mxu0 %v238
    %272 = vmatprep.subr.mxu0 0.0
    %273 = vmatpush1.msra.mxu0 %v239
    %274 = vmatprep.subr.mxu0 0.0
    %275 = vmatpush1.msra.mxu0 %v240
    %276 = vmatprep.subr.mxu0 0.0
    %277 = vmatpush1.msra.mxu0 %v241
    %278 = vmatprep.subr.mxu0 0.0
    %279 = vmatpush1.msra.mxu0 %v242
    %280 = vmatprep.subr.mxu0 0.0
    %281 = vmatpush1.msra.mxu0 0.0
    %282 = vmatprep.subr.mxu0 0.0
    %283 = vmatpush1.msra.mxu0 0.0
    %284 = vmatprep.subr.mxu0 0.0
    %285 = vmatpush1.msra.mxu0 0.0
    %286 = vmatprep.subr.mxu0 0.0
    %287 = vmatpush1.msra.mxu0 0.0
    %288 = vmatprep.subr.mxu0 0.0
    %289 = vmatpush1.msra.mxu0 0.0
    %290 = vmatprep.subr.mxu0 0.0
    %291 = vmatpush1.msra.mxu0 0.0
    %292 = vmatprep.subr.mxu0 0.0
    %293 = vmatpush1.msra.mxu0 0.0
    %294 = vmatprep.subr.mxu0 0.0
    %295 = vmatpush1.msra.mxu0 0.0
    %296 = vmatprep.subr.mxu0 0.0
    %297 = vmatpush1.msra.mxu0 0.0
    %298 = vmatprep.subr.mxu0 0.0
    %299 = vmatpush1.msra.mxu0 0.0
    %300 = vmatprep.subr.mxu0 0.0
    %301 = vmatpush1.msra.mxu0 0.0
    %302 = vmatprep.subr.mxu0 0.0
    %303 = vmatpush1.msra.mxu0 0.0
    %304 = vmatprep.subr.mxu0 0.0
    %305 = vmatpush1.msra.mxu0 0.0
    %306 = vmatprep.subr.mxu0 0.0
    %307 = vmatpush1.msra.mxu0 0.0
    %308 = vmatprep.subr.mxu0 0.0
    %309 = vmatpush1.msra.mxu0 0.0
    %310 = vmatprep.subr.mxu0 0.0
    %311 = vmatpush1.msra.mxu0 0.0
    %312 = vmatprep.mubr.f32.mxu0 0.0
    %313 = vmatmul.mubr.f32.gmra.mrb[0].mxu0 %v225
    %v314 = vpop.f32.mrb[0].mxu0
    %v315 = vadd.f32 %v247, %v314
    %v316 = vpop.f32.mrb[0].mxu0
    %317 = vdwg.mxu0
    %v318 = vmax.f32 %v315, 0.0
    %s319 = scalar_lea.vmem [#allocation5], 384
    %v320 = vld [vmem:[%s319] sm:$0xff]
    %v321 = vld [vmem:[%s319 + $0x8] sm:$0xff]
    %v322 = vld [vmem:[%s319 + $0x10] sm:$0xff]
    %v323 = vld [vmem:[%s319 + $0x18] sm:$0xff]
    %v324 = vld [vmem:[%s319 + $0x20] sm:$0xff]
    %v325 = vld [vmem:[%s319 + $0x28] sm:$0xff]
    %v326 = vld [vmem:[%s319 + $0x30] sm:$0xff]
    %v327 = vld [vmem:[%s319 + $0x38] sm:$0xff]
    %v328 = vld [vmem:[%s319 + $0x40] sm:$0xff]
    %v329 = vld [vmem:[%s319 + $0x48] sm:$0xff]
    %v330 = vld [vmem:[%s319 + $0x50] sm:$0xff]
    %v331 = vld [vmem:[%s319 + $0x58] sm:$0xff]
    %v332 = vld [vmem:[%s319 + $0x60] sm:$0xff]
    %v333 = vld [vmem:[%s319 + $0x68] sm:$0xff]
    %v334 = vld [vmem:[%s319 + $0x70] sm:$0xff]
    %v335 = vld [vmem:[%s319 + $0x78] sm:$0xff]
    %v336 = vld [vmem:[%s2 + $0x3] sm:$0x1]
    %v337 = vlaneseq
    %v338 = vshrl.u32 %v337, 7
    %v339 = vsub.s32 0, %v338
    %v340 = vrot.slane %v336, %v339
    %341 = vmatprep.subr.mxu0 0.0
    %342 = vmatpush1.msra.mxu0 %v320
    %343 = vmatprep.subr.mxu0 0.0
    %344 = vmatpush1.msra.mxu0 %v321
    %345 = vmatprep.subr.mxu0 0.0
    %346 = vmatpush1.msra.mxu0 %v322
    %347 = vmatprep.subr.mxu0 0.0
    %348 = vmatpush1.msra.mxu0 %v323
    %349 = vmatprep.subr.mxu0 0.0
    %350 = vmatpush1.msra.mxu0 %v324
    %351 = vmatprep.subr.mxu0 0.0
    %352 = vmatpush1.msra.mxu0 %v325
    %353 = vmatprep.subr.mxu0 0.0
    %354 = vmatpush1.msra.mxu0 %v326
    %355 = vmatprep.subr.mxu0 0.0
    %356 = vmatpush1.msra.mxu0 %v327
    %357 = vmatprep.subr.mxu0 0.0
    %358 = vmatpush1.msra.mxu0 %v328
    %359 = vmatprep.subr.mxu0 0.0
    %360 = vmatpush1.msra.mxu0 %v329
    %361 = vmatprep.subr.mxu0 0.0
    %362 = vmatpush1.msra.mxu0 %v330
    %363 = vmatprep.subr.mxu0 0.0
    %364 = vmatpush1.msra.mxu0 %v331
    %365 = vmatprep.subr.mxu0 0.0
    %366 = vmatpush1.msra.mxu0 %v332
    %367 = vmatprep.subr.mxu0 0.0
    %368 = vmatpush1.msra.mxu0 %v333
    %369 = vmatprep.subr.mxu0 0.0
    %370 = vmatpush1.msra.mxu0 %v334
    %371 = vmatprep.subr.mxu0 0.0
    %372 = vmatpush1.msra.mxu0 %v335
    %373 = vmatprep.subr.mxu0 0.0
    %374 = vmatpush1.msra.mxu0 0.0
    %375 = vmatprep.subr.mxu0 0.0
    %376 = vmatpush1.msra.mxu0 0.0
    %377 = vmatprep.subr.mxu0 0.0
    %378 = vmatpush1.msra.mxu0 0.0
    %379 = vmatprep.subr.mxu0 0.0
    %380 = vmatpush1.msra.mxu0 0.0
    %381 = vmatprep.subr.mxu0 0.0
    %382 = vmatpush1.msra.mxu0 0.0
    %383 = vmatprep.subr.mxu0 0.0
    %384 = vmatpush1.msra.mxu0 0.0
    %385 = vmatprep.subr.mxu0 0.0
    %386 = vmatpush1.msra.mxu0 0.0
    %387 = vmatprep.subr.mxu0 0.0
    %388 = vmatpush1.msra.mxu0 0.0
    %389 = vmatprep.subr.mxu0 0.0
    %390 = vmatpush1.msra.mxu0 0.0
    %391 = vmatprep.subr.mxu0 0.0
    %392 = vmatpush1.msra.mxu0 0.0
    %393 = vmatprep.subr.mxu0 0.0
    %394 = vmatpush1.msra.mxu0 0.0
    %395 = vmatprep.subr.mxu0 0.0
    %396 = vmatpush1.msra.mxu0 0.0
    %397 = vmatprep.subr.mxu0 0.0
    %398 = vmatpush1.msra.mxu0 0.0
    %399 = vmatprep.subr.mxu0 0.0
    %400 = vmatpush1.msra.mxu0 0.0
    %401 = vmatprep.subr.mxu0 0.0
    %402 = vmatpush1.msra.mxu0 0.0
    %403 = vmatprep.subr.mxu0 0.0
    %404 = vmatpush1.msra.mxu0 0.0
    %405 = vmatprep.mubr.f32.mxu0 0.0
    %406 = vmatmul.mubr.f32.gmra.mrb[0].mxu0 %v318
    %v407 = vpop.f32.mrb[0].mxu0
    %v408 = vadd.f32 %v340, %v407
    %v409 = vpop.f32.mrb[0].mxu0
    %410 = vdwg.mxu0
    %411 = vst [vmem:[#allocation7] sm:$0xff] %v408
    // Predicated region
    $region22: #{tpu_custom_call.1} parent=1 // pred_check
      _
    $region23: #{tpu_custom_call.1} parent=1 // pred_check_branch
      %413 = sbr.rel (0) target = $region25
    $region24: #{tpu_custom_call.1} parent=1 // pred_region
      %s415 = ssub.s32 128, 128
      %416 = vsyncadd [#allocation4], %s415
      %s418 = sshll.u32 [#allocation7], 4
      %s419 = int_to_ptr.vmem [resolvable:$true] %s418
      %421 = dma.vmem_to_hbm [thread:$0]  %s419, 128, %s3, [#allocation4]
    $region25: #{tpu_custom_call.1} parent=1 // pred_fallthru
      _
    // Predicated region
    $region26: #{tpu_custom_call.1} parent=1 // pred_check
      _
    $region27: #{tpu_custom_call.1} parent=1 // pred_check_branch
      %423 = sbr.rel (0) target = $region29
    $region28: #{tpu_custom_call.1} parent=1 // pred_region
      %424 = dma.done [#allocation4], 128
    $region29: #{tpu_custom_call.1} parent=1 // pred_fallthru
      _
    %425 = vsyncpa [#allocation3], 1
    %426 = vsyncpa [#allocation6], 1
    %427 = vsyncpa [#allocation4], 1

</llo_original>
